<compile_context>
chip_gen: v6e
topology: v6e:2x2x1
jax: 0.10.0
libtpu: 0.0.40
codegen_flags: <defaults>
</compile_context>

<pallas_src>
import jax
import jax.numpy as jnp
from jax.experimental import pallas as pl
from jax.experimental.pallas import tpu as pltpu


def _copy_kernel(x_ref, o_ref):
    # Both refs are (Bt, groups, T) after squeezing; the channel shuffle is
    # done by the BlockSpec index maps, so this is a straight copy.
    o_ref[...] = x_ref[...]


def _vmem_capacity_bytes() -> int:
    try:
        return int(pltpu.get_tpu_info().vmem_capacity_bytes)
    except Exception:
        return 64 * 1024 * 1024          # conservative (v7x per-TensorCore)


def _padded_block_bytes(bt: int, groups: int, t: int, itemsize: int) -> int:
    # Conservative VMEM footprint of one (bt, groups, 1, 1, t) block: each
    # (1, t) row may occupy a full sublane tile (8 rows for 32-bit, 16 for
    # 16-bit, 32 for 8-bit dtypes) and the lane dim pads up to 128.
    sublane = max(8, 32 // itemsize)
    lanes = pl.cdiv(t, 128) * 128
    return bt * groups * sublane * lanes * itemsize


def _pick_tiles(B: int, groups: int, HW: int, itemsize: int, budget: int):
    """Pick (batch_tile, spatial_tile) so 2 in + 2 out double-buffered blocks
    fit `budget`, preferring a full spatial plane (contiguous output DMA) and
    growing the batch tile to amortize per-grid-step overhead."""
    def fits(bt, t):
        return 4 * _padded_block_bytes(bt, groups, t, itemsize) <= budget

    if fits(1, HW):
        t = HW
        bt = 1
        while bt < B and fits(min(2 * bt, B), t):
            bt = min(2 * bt, B)
    else:
        bt = 1
        if HW <= 128:
            t = HW                          # tiny plane; groups alone is huge
        else:
            sublane = max(8, 32 // itemsize)
            max_lanes = budget // (4 * groups * sublane * itemsize)
            t = max(128, (max_lanes // 128) * 128)      # lane-dense tile
            t = min(t, max(128, (HW // 128) * 128))
    return bt, t


def channel_shuffle(x: jax.Array, groups: int,
                    spatial_tile: int | None = None,
                    batch_tile: int | None = None) -> jax.Array:
    """Pallas TPU implementation of ChannelShuffle.forward for (N, C, *spatial)."""
    assert x.ndim >= 2
    B, C = int(x.shape[0]), int(x.shape[1])
    spatial = tuple(int(d) for d in x.shape[2:])
    assert C % groups == 0, "channels must be divisible by groups"
    cpg = C // groups
    HW = 1
    for d in spatial:
        HW *= d
    itemsize = jnp.dtype(x.dtype).itemsize

    cap = _vmem_capacity_bytes()
    budget = cap // 3                       # for the 4 double-buffered blocks
    bt, t = _pick_tiles(B, groups, HW, itemsize, budget)
    if batch_tile is not None:
        bt = max(1, min(int(batch_tile), B))
    if spatial_tile is not None:
        t = max(1, min(int(spatial_tile), HW))
    assert t == HW or t % 128 == 0, "spatial tile must be a multiple of 128 or the full plane"

    n_b = pl.cdiv(B, bt)
    n_t = pl.cdiv(HW, t)
    if spatial_tile is None and batch_tile is None and n_b * cpg * n_t < 2:
        # Guarantee >=2 grid steps so v7x's two TensorCores both get work.
        if B > 1:
            bt = pl.cdiv(B, 2)
            n_b = pl.cdiv(B, bt)
        elif HW >= 256:
            t = pl.cdiv(pl.cdiv(HW, 2), 128) * 128
            n_t = pl.cdiv(HW, t)

    padded_block = _padded_block_bytes(bt, groups, t, itemsize)
    needed = 4 * padded_block + (8 << 20)   # 4 buffers + Mosaic scratch headroom
    vmem_limit = int(min(max(needed, 32 << 20), cap * 9 // 10))

    # Free reshapes: input channel-major order is (groups, cpg); the output's
    # natural memory layout is (cpg, groups).  The trailing singleton axis
    # keeps every block's last-two dims trivially legal: (1, T).
    xf = x.reshape(B, groups, cpg, 1, HW)

    out = pl.pallas_call(
        _copy_kernel,
        out_shape=jax.ShapeDtypeStruct((B, cpg, groups, 1, HW), x.dtype),
        grid_spec=pltpu.PrefetchScalarGridSpec(
            num_scalar_prefetch=0,
            grid=(n_b, cpg, n_t),
            in_specs=[pl.BlockSpec((bt, groups, None, None, t),
                                   lambda b, c, s: (b, 0, c, 0, s))],
            out_specs=pl.BlockSpec((bt, None, groups, None, t),
                                   lambda b, c, s: (b, c, 0, 0, s)),
        ),
        compiler_params=pltpu.CompilerParams(
            dimension_semantics=("parallel", "parallel", "parallel"),
            vmem_limit_bytes=vmem_limit,
        ),
        cost_estimate=pl.CostEstimate(
            flops=0, transcendentals=0,
            bytes_accessed=2 * B * C * HW * itemsize),
    )(xf)
    return out.reshape(B, C, *spatial)


def channel_shuffle_ref(x: jnp.ndarray, groups: int) -> jnp.ndarray:
    """Pure-JAX reference matching the PyTorch forward exactly."""
    B, C = x.shape[0], x.shape[1]
    spatial = x.shape[2:]
    y = x.reshape(B, groups, C // groups, *spatial)
    y = jnp.swapaxes(y, 1, 2)
    return y.reshape(B, C, *spatial)


if __name__ == "__main__":
    key = jax.random.PRNGKey(0)

    # Test 1: nominal small shape (H*W = 256 lane-dense plane, batch-tiled block).
    x1 = jax.random.normal(key, (2, 4, 16, 16), dtype=jnp.float32)
    o1 = jax.block_until_ready(channel_shuffle(x1, groups=2))
    r1 = channel_shuffle_ref(x1, groups=2)
    assert o1.shape == r1.shape and o1.dtype == r1.dtype
    assert jnp.array_equal(o1, r1), "mismatch on (2,4,16,16) g=2"

    # Test 2: odd spatial size (H*W = 35 -> full-plane lane block).
    x2 = jax.random.normal(jax.random.PRNGKey(1), (2, 6, 5, 7), dtype=jnp.float32)
    o2 = jax.block_until_ready(channel_shuffle(x2, groups=3))
    assert jnp.array_equal(o2, channel_shuffle_ref(x2, groups=3)), "mismatch on (2,6,5,7) g=3"

    # Test 3: spatially tiled path (H*W = 1024 split into 4 lane-dense tiles of 256).
    x3 = jax.random.normal(jax.random.PRNGKey(2), (1, 8, 32, 32), dtype=jnp.float32)
    o3 = jax.block_until_ready(channel_shuffle(x3, groups=4, spatial_tile=256))
    assert jnp.array_equal(o3, channel_shuffle_ref(x3, groups=4)), "mismatch on (1,8,32,32) g=4"

    print("KERNEL_OK")
</pallas_src>

<mosaic_0001>
module attributes {stable_mosaic.version = 11 : i64} {
  func.func @_copy_kernel(%arg0: i32, %arg1: i32, %arg2: i32, %arg3: memref<2x2x1x1x256xf32, #tpu.memory_space<vmem>>, %arg4: memref<2x1x2x1x256xf32, #tpu.memory_space<vmem>>) attributes {dimension_semantics = [#tpu.dimension_semantics<parallel>, #tpu.dimension_semantics<parallel>, #tpu.dimension_semantics<parallel>], iteration_bounds = array<i64: 1, 2, 1>, scalar_prefetch = 0 : i64, scratch_operands = 0 : i64, tpu.core_type = #tpu.core_type<tc>, window_params = [{transform_indices = @transform_0, window_bounds = array<i64: 2, 2, 1, 1, 256>}, {transform_indices = @transform_1, window_bounds = array<i64: 2, 1, 2, 1, 256>}]} {
    %c0 = arith.constant 0 : index
    %c0_0 = arith.constant 0 : index
    %c0_1 = arith.constant 0 : index
    %c0_2 = arith.constant 0 : index
    %c0_3 = arith.constant 0 : index
    %0 = vector.load %arg3[%c0, %c0_0, %c0_1, %c0_2, %c0_3] : memref<2x2x1x1x256xf32, #tpu.memory_space<vmem>>, vector<2x2x1x1x256xf32>
    %1 = vector.shape_cast %0 : vector<2x2x1x1x256xf32> to vector<2x2x256xf32>
    %c0_4 = arith.constant 0 : index
    %c0_5 = arith.constant 0 : index
    %c0_6 = arith.constant 0 : index
    %c0_7 = arith.constant 0 : index
    %c0_8 = arith.constant 0 : index
    %2 = vector.load %arg4[%c0_4, %c0_5, %c0_6, %c0_7, %c0_8] : memref<2x1x2x1x256xf32, #tpu.memory_space<vmem>>, vector<2x1x2x1x256xf32>
    %3 = vector.shape_cast %2 : vector<2x1x2x1x256xf32> to vector<2x2x256xf32>
    %4 = vector.shape_cast %1 : vector<2x2x256xf32> to vector<2x1x2x1x256xf32>
    tpu.vector_store %arg4[%c0_4, %c0_5, %c0_6, %c0_7, %c0_8], %4 {strides = array<i32>} : memref<2x1x2x1x256xf32, #tpu.memory_space<vmem>>, vector<2x1x2x1x256xf32>,
    return
  }
  func.func @transform_0(%arg0: i32, %arg1: i32, %arg2: i32) -> (i32, i32, i32, i32, i32) {
    %c0_i32 = arith.constant 0 : i32
    %c0_i32_0 = arith.constant 0 : i32
    %c0_i32_1 = arith.constant 0 : i32
    return %arg0, %c0_i32, %arg1, %c0_i32_0, %arg2 : i32, i32, i32, i32, i32
  }
  func.func @transform_1(%arg0: i32, %arg1: i32, %arg2: i32) -> (i32, i32, i32, i32, i32) {
    %c0_i32 = arith.constant 0 : i32
    %c0_i32_0 = arith.constant 0 : i32
    %c0_i32_1 = arith.constant 0 : i32
    return %arg0, %arg1, %c0_i32, %c0_i32_0, %arg2 : i32, i32, i32, i32, i32
  }
}

</mosaic_0001>

<llo_original>
// kernel: tpu_custom_call.1
$region0: #{tpu_custom_call.1}
  #allocation0 [shape = 'u32[]', space=smem, size = 0x4, offset = 0x4, fixed_abs, tag = 'smem constant byte address 0x4 - core index']
  #allocation1 [shape = 'u32[144,128]{1,0:T(1,128)}', space=vmem, size = 0x12000, scoped, tag = 'internal scratch']
  #allocation6 [shape = 's32[]', space=sflag, size = 0x4, offset = 0, fixed_abs, tag = 'sflag constant byte address 0x0 - dummy sync flag']
  %s0 = inlined_call_operand.hbm [shape: f32[2,2,2,1,256], index: 0, kind: input, shape index: {}]
  %s1 = inlined_call_operand.hbm [shape: f32[2,2,2,1,256], index: 1, kind: output, shape index: {}]
  %s2 = sld [smem:[#allocation0]]
  $region41: #{tpu_custom_call.1} parent=0
    _
  %s4 = ssub.s32 1, %s2
  %s5 = scalar_select 0, %s4, %s2
  $region1: #{tpu_custom_call.1} parent=0
    #allocation2 [shape = 'u8[8192]{0}', space=vmem, size = 0x2000, scoped, tag = 'input window, operand 0']
    #allocation3 [shape = 's32[2]{0}', space=sflag, size = 0x8, scoped, tag = 'scoped memory for tpu_custom_call.1']
    #allocation4 [shape = 's32[2]{0}', space=sflag, size = 0x8, scoped, tag = 'scoped memory for tpu_custom_call.1']
    #allocation5 [shape = 'u8[8192]{0}', space=vmem, size = 0x2000, scoped, tag = 'output window, operand 0']
    %6 = vsyncpa [#allocation3], 0
    %s7 = scalar_lea.sflag [#allocation3], 1
    %8 = vsyncpa %s7, 0
    %9 = vsyncpa [#allocation4], 0
    %s10 = scalar_lea.sflag [#allocation4], 1
    %11 = vsyncpa %s10, 0
    loop: start=0, step=1, limit=4
    $region2: #{tpu_custom_call.1} parent=1 // loop_pre_header
      _
    $region3: #{tpu_custom_call.1} parent=1 // loop_header
      %s13 = sphi 0, %s17
      %p14 = scmp.ge.s32.totalorder %s13, 4
      %s20 = sphi 0, %s39
      %s21 = sphi 0, %s35
      %s22 = sphi 0, %s31
      %s23 = sphi 0, %s20
      %s24 = sphi 0, %s21
      %s25 = sphi 0, %s22
      %s26 = sphi 0, %s23
      %s27 = sphi 0, %s24
      %s28 = sphi 0, %s25
      %s46 = sphi 0, %s48
      %s49 = sphi 0, %s46
      %s50 = sphi 0, %s49
      %s66 = sphi 0, %s50
      %s76 = sphi 0, %s78
      %s79 = sphi 0, %s76
      %s80 = sphi 0, %s79
      %s96 = sphi 0, %s80
    $region4: #{tpu_custom_call.1} parent=1 // loop_header_branch
      %16 = sbr.rel (%p14) target = $region8
    $region5: #{tpu_custom_call.1} parent=1 // loop_body
      %s18 = ssub.s32 %s13, 1
      %s19 = ssub.s32 %s13, 2
      %s29 = sadd.s32 1, %s22
      %p30 = scmp.ge.s32.totalorder %s29, 1
      %s31 = scalar_select %p30, 0, %s29
      %s32 = sadd.s32 1, %s21
      %s33 = scalar_select %p30, %s32, %s21
      %p34 = scmp.ge.s32.totalorder %s33, 2
      %s35 = scalar_select %p34, 0, %s33
      %s36 = sadd.s32 1, %s20
      %s37 = scalar_select %p34, %s36, %s20
      %p38 = scmp.ge.s32.totalorder %s37, 1
      %s39 = scalar_select %p38, 0, %s37
      %s40 = ssub.s32 %s20, %s39
      %s41 = ssub.s32 %s21, %s35
      %s42 = sor.u32 %s40, %s41
      %s43 = ssub.s32 %s22, %s31
      %s44 = sor.u32 %s42, %s43
      %p45 = scmp.eq.s32.totalorder %s44, 0
      %s47 = sadd.s32 %s46, 1
      %s48 = scalar_select %p45, %s46, %s47
      %p51 = pneg %p45
      %p52 = scmp.eq.s32.totalorder %s13, 1
      %p53 = por %p51, %p52
      %p54 = scmp.ne.s32.totalorder %s46, %s49
      %p55 = scmp.eq.s32.totalorder %s13, 0
      %p56 = por %p54, %p55
      %p57 = scmp.ne.s32.totalorder %s46, %s49
      %p58 = scmp.eq.s32.totalorder %s18, 1
      %p59 = por %p57, %p58
      %p60 = scmp.ne.s32.totalorder %s49, %s50
      %p61 = scmp.eq.s32.totalorder %s18, 0
      %p62 = por %p60, %p61
      %p63 = scmp.ne.s32.totalorder %s49, %s50
      %p64 = scmp.eq.s32.totalorder %s19, 1
      %p65 = por %p63, %p64
      %p67 = scmp.ne.s32.totalorder %s50, %s66
      %p68 = scmp.eq.s32.totalorder %s19, 0
      %p69 = por %p67, %p68
      %s70 = ssub.s32 %s20, %s39
      %s71 = ssub.s32 %s21, %s35
      %s72 = sor.u32 %s70, %s71
      %s73 = ssub.s32 %s22, %s31
      %s74 = sor.u32 %s72, %s73
      %p75 = scmp.eq.s32.totalorder %s74, 0
      %s77 = sadd.s32 %s76, 1
      %s78 = scalar_select %p75, %s76, %s77
      %p81 = pneg %p75
      %p82 = scmp.eq.s32.totalorder %s13, 1
      %p83 = por %p81, %p82
      %p84 = scmp.ne.s32.totalorder %s76, %s79
      %p85 = scmp.eq.s32.totalorder %s13, 0
      %p86 = por %p84, %p85
      %p87 = scmp.ne.s32.totalorder %s76, %s79
      %p88 = scmp.eq.s32.totalorder %s18, 1
      %p89 = por %p87, %p88
      %p90 = scmp.ne.s32.totalorder %s79, %s80
      %p91 = scmp.eq.s32.totalorder %s18, 0
      %p92 = por %p90, %p91
      %p93 = scmp.ne.s32.totalorder %s79, %s80
      %p94 = scmp.eq.s32.totalorder %s19, 1
      %p95 = por %p93, %p94
      %p97 = scmp.ne.s32.totalorder %s80, %s96
      %p98 = scmp.eq.s32.totalorder %s19, 0
      %p99 = por %p97, %p98
      %p100 = scmp.le.s32.totalorder 1, %s13
      %p101 = scmp.lt.s32.totalorder %s13, 3
      %p102 = pnand %p100, %p101
      %p103 = pneg %p102
      // Predicated region
      $region9: #{tpu_custom_call.1} parent=5 // pred_check
        _
      $region10: #{tpu_custom_call.1} parent=5 // pred_check_branch
        %105 = sbr.rel (%p102) target = $region12
      $region11: #{tpu_custom_call.1} parent=5 // pred_region
        %s106 = ssub.s32 %s13, 1
      $region12: #{tpu_custom_call.1} parent=5 // pred_fallthru
        _
      %p107 = scmp.lt.s32.totalorder %s13, 2
      // Predicated region
      $region13: #{tpu_custom_call.1} parent=5 // pred_check
        %p108 = pneg %p107
      $region14: #{tpu_custom_call.1} parent=5 // pred_check_branch
        %110 = sbr.rel (%p108) target = $region16
      $region15: #{tpu_custom_call.1} parent=5 // pred_region
        // Predicated region
        $region17: #{tpu_custom_call.1} parent=15 // pred_check
          %p111 = pneg %p56
        $region18: #{tpu_custom_call.1} parent=15 // pred_check_branch
          %113 = sbr.rel (%p111) target = $region20
        $region19: #{tpu_custom_call.1} parent=15 // pred_region
          %s114 = sand.u32 %s46, 1
          %s115 = scalar_lea.sflag [#allocation3], %s114
          %s116 = sand.u32 %s46, 1
          %s117 = smul.addr %s116, 8
          %s118 = scalar_lea.vmem [#allocation2], %s117
          %s119 = smul.u32 2, %s20
          %s120 = smul.u32 2, %s22
          %s122 = ssub.s32 128, 128
          %123 = vsyncadd %s115, %s122
          %s124 = smul.addr %s21, 2
          %s125 = sadd.s32 %s120, %s124
          %s126 = smul.addr %s119, 8
          %s127 = sadd.s32 %s125, %s126
          %s128 = smul.addr %s127, 16
          %s129 = scalar_lea.hbm %s0, %s128
          %s130 = sshll.u32 %s118, 4
          %s131 = int_to_ptr.vmem [resolvable:$true] %s130
          %136 = dma.hbm_to_vmem [thread:$0]  %s129, 128, %s131, %s115, 64, 32, 2
        $region20: #{tpu_custom_call.1} parent=15 // pred_fallthru
          _
      $region16: #{tpu_custom_call.1} parent=5 // pred_fallthru
        _
      %p137 = scmp.le.s32.totalorder 1, %s13
      %p138 = scmp.lt.s32.totalorder %s13, 3
      %p139 = pnand %p137, %p138
      %p140 = pneg %p139
      // Predicated region
      $region21: #{tpu_custom_call.1} parent=5 // pred_check
        _
      $region22: #{tpu_custom_call.1} parent=5 // pred_check_branch
        %142 = sbr.rel (%p139) target = $region24
      $region23: #{tpu_custom_call.1} parent=5 // pred_region
        %s143 = ssub.s32 %s13, 1
        %s144 = sand.u32 %s49, 1
        %s145 = scalar_lea.sflag [#allocation3], %s144
        %s146 = sand.u32 %s49, 1
        %s147 = smul.addr %s146, 8
        %s148 = scalar_lea.vmem [#allocation2], %s147
        // Predicated region
        $region25: #{tpu_custom_call.1} parent=23 // pred_check
          %p149 = pneg %p62
        $region26: #{tpu_custom_call.1} parent=23 // pred_check_branch
          %151 = sbr.rel (%p149) target = $region28
        $region27: #{tpu_custom_call.1} parent=23 // pred_region
          %152 = dma.done %s145, 128
        $region28: #{tpu_custom_call.1} parent=23 // pred_fallthru
          _
        %s153 = sand.u32 %s49, 1
        %s154 = scalar_lea.sflag [#allocation3], %s153
        %s155 = sand.u32 %s49, 1
        %s156 = smul.addr %s155, 8
        %s157 = scalar_lea.vmem [#allocation2], %s156
        %p158 = pneg %p62
        %p159 = pneg %p59
        %p160 = pneg %p92
        %p161 = pneg %p89
        %s162 = sand.u32 %s79, 1
        %s163 = scalar_lea.sflag [#allocation4], %s162
        %s164 = sand.u32 %s79, 1
        %s165 = smul.addr %s164, 8
        %s166 = scalar_lea.vmem [#allocation5], %s165
        %s167 = smul.u32 2, %s23
        %s168 = smul.u32 2, %s25
        %s169 = smul.u32 2, %s23
        %s170 = smul.u32 2, %s25
        %v171 = vld [vmem:[%s148] sm:$0x3]
        %v172 = vld [vmem:[%s148 + $0x2] sm:$0x3]
        %v173 = vld [vmem:[%s148 + $0x4] sm:$0x3]
        %v174 = vld [vmem:[%s148 + $0x6] sm:$0x3]
        %v175 = vlaneseq
        %vm176 = vcmp.ge.s32.totalorder %v175, 0
        %vm177 = vcmp.lt.s32.totalorder %v175, 256
        %vm178 = vmand %vm176, %vm177
        %179 = vst.msk [vmem:[%s166] sm:$0x3] %vm178, %v171
        %180 = vst.msk [vmem:[%s166 + $0x2] sm:$0x3] %vm178, %v172
        %181 = vst.msk [vmem:[%s166 + $0x4] sm:$0x3] %vm178, %v173
        %182 = vst.msk [vmem:[%s166 + $0x6] sm:$0x3] %vm178, %v174
        %s183 = sand.u32 %s79, 1
        %s184 = scalar_lea.sflag [#allocation4], %s183
        %s185 = sand.u32 %s79, 1
        %s186 = smul.addr %s185, 8
        %s187 = scalar_lea.vmem [#allocation5], %s186
        // Predicated region
        $region29: #{tpu_custom_call.1} parent=23 // pred_check
          %p188 = pneg %p89
        $region30: #{tpu_custom_call.1} parent=23 // pred_check_branch
          %190 = sbr.rel (%p188) target = $region32
        $region31: #{tpu_custom_call.1} parent=23 // pred_region
          #allocation7 [shape = 'u32[6]{0}', space=smem, size = 0x18, scoped, tag = 'DMA stride descriptor']
          %s191 = smul.u32 2, %s23
          %s192 = smul.u32 2, %s25
          %s194 = ssub.s32 128, 128
          %195 = vsyncadd %s184, %s194
          %s196 = smul.addr %s24, 4
          %s197 = sadd.s32 %s192, %s196
          %s198 = smul.addr %s191, 8
          %s199 = sadd.s32 %s197, %s198
          %s200 = smul.addr %s199, 16
          %s201 = scalar_lea.hbm %s1, %s200
          %s203 = sshll.u32 1, 14
          %s204 = sxor.u32 4294967295, %s203
          %s207 = sshll.u32 7, 18
          %s208 = sxor.u32 4294967295, %s207
          %s209 = sand.u32 0, %s208
          %s211 = sor.u32 %s209, 0
          %s212 = sshll.u32 %s187, 4
          %s213 = int_to_ptr.vmem [resolvable:$true] %s212
          %219 = sst [smem:[#allocation7]] 64
          %s220 = scalar_lea.smem [#allocation7], 1
          %221 = sst [smem:[%s220]] 128
          %s222 = scalar_lea.smem [#allocation7], 2
          %223 = sst [smem:[%s222]] 2
          %s224 = scalar_lea.smem [#allocation7], 3
          %225 = sst [smem:[%s224]] 32
          %s226 = scalar_lea.smem [#allocation7], 4
          %227 = sst [smem:[%s226]] 32
          %s228 = scalar_lea.smem [#allocation7], 5
          %229 = sst [smem:[%s228]] 2
          %231 = dma.general %s213, 128, %s201, %s184, 131072, [#allocation7], %s211, 0
        $region32: #{tpu_custom_call.1} parent=23 // pred_fallthru
          _
      $region24: #{tpu_custom_call.1} parent=5 // pred_fallthru
        _
      %p232 = scmp.le.s32.totalorder 2, %s13
      // Predicated region
      $region33: #{tpu_custom_call.1} parent=5 // pred_check
        %p233 = pneg %p232
      $region34: #{tpu_custom_call.1} parent=5 // pred_check_branch
        %235 = sbr.rel (%p233) target = $region36
      $region35: #{tpu_custom_call.1} parent=5 // pred_region
        %s236 = ssub.s32 %s13, 2
        // Predicated region
        $region37: #{tpu_custom_call.1} parent=35 // pred_check
          %p237 = pneg %p95
        $region38: #{tpu_custom_call.1} parent=35 // pred_check_branch
          %239 = sbr.rel (%p237) target = $region40
        $region39: #{tpu_custom_call.1} parent=35 // pred_region
          %s240 = sand.u32 %s80, 1
          %s241 = scalar_lea.sflag [#allocation4], %s240
          %s242 = sand.u32 %s80, 1
          %s243 = smul.addr %s242, 8
          %s244 = scalar_lea.vmem [#allocation5], %s243
          %245 = dma.done %s241, 128
        $region40: #{tpu_custom_call.1} parent=35 // pred_fallthru
          _
      $region36: #{tpu_custom_call.1} parent=5 // pred_fallthru
        _
    $region6: #{tpu_custom_call.1} parent=1 // loop_footer
      %s17 = sadd.s32 1, %s13
    $region7: #{tpu_custom_call.1} parent=1 // loop_footer_branch
      %12 = sbr.rel target = $region3
    $region8: #{tpu_custom_call.1} parent=1 // loop_exit
      _
    %246 = vsyncpa [#allocation3], 1
    %s247 = scalar_lea.sflag [#allocation3], 1
    %248 = vsyncpa %s247, 1
    %249 = vsyncpa [#allocation4], 1
    %s250 = scalar_lea.sflag [#allocation4], 1
    %251 = vsyncpa %s250, 1

</llo_original>
